<compile_context>
chip_gen: v7x
topology: tpu7x:2x2x1
jax: 0.10.0
libtpu: 0.0.40
codegen_flags: <defaults>
</compile_context>

<pallas_src>
import math

import jax
import jax.numpy as jnp
import numpy as np
from jax.experimental import pallas as pl
from jax.experimental.pallas import tpu as pltpu


def _lstm_recurrence_kernel(gx_ref, whh_ref, out_ref):
    """Single-invocation LSTM recurrence.

    gx_ref : (B, T, 4H)  precomputed input projection x @ W_ih^T + (b_ih + b_hh)
    whh_ref: (H, 4H)     W_hh transposed
    out_ref: (B, T*H)    all hidden states, packed lane-dense along the last dim
    """
    B, T, G = gx_ref.shape
    H = whh_ref.shape[0]

    gx = gx_ref[...]     # (B, T, 4H) — one full VMEM load, reused per step
    whh = whh_ref[...]   # (H, 4H)    — loaded once, reused every step

    h = jnp.zeros((B, H), jnp.float32)
    c = jnp.zeros((B, H), jnp.float32)

    # T is small and static -> fully unrolled loop; the recurrence is strictly
    # sequential, so the only per-step work on the critical path is one small
    # MXU matmul plus the gate elementwise math.
    for t in range(T):
        gates = gx[:, t, :] + jnp.dot(h, whh, preferred_element_type=jnp.float32)  # (B, 4H)

        # Full-vreg transcendentals (EUP has its own VLIW slot); slice after.
        sig = jax.nn.sigmoid(gates)
        th = jnp.tanh(gates)
        i_g = sig[:, 0 * H:1 * H]
        f_g = sig[:, 1 * H:2 * H]
        g_g = th[:, 2 * H:3 * H]
        o_g = sig[:, 3 * H:4 * H]

        c = f_g * c + i_g * g_g
        h = o_g * jnp.tanh(c)

        # Static lane-offset store into the lane-dense (B, T*H) output slab;
        # the whole slab is DMA'd back to HBM once at kernel end.
        out_ref[:, t * H:(t + 1) * H] = h.astype(out_ref.dtype)


def lstm_forward_pallas(obs, w_ih, w_hh, b_ih, b_hh, obs_shape):
    """Mirrors LSTMFeatureExtractor.forward for a single-layer batch_first LSTM.

    obs: any leading shape; reshaped to (-1,) + obs_shape = (B, T, D).
    Returns h_lstm with shape (B, T, H).
    """
    obs = jnp.reshape(obs, (-1,) + tuple(obs_shape)).astype(jnp.float32)  # (B, T, D)
    B, T, D = obs.shape
    H = w_hh.shape[1]
    G = 4 * H

    # Hoisted input projection: one MXU-friendly batched matmul replacing T
    # tiny per-step dots.  The W_ih transpose is folded into the dot_general
    # and the result stays batch-first, so no activation transpose is emitted.
    bias = (b_ih + b_hh).astype(jnp.float32)
    gates_x = jnp.einsum("btd,gd->btg", obs, w_ih.astype(jnp.float32)) + bias  # (B, T, 4H)

    whh_t = jnp.transpose(w_hh).astype(jnp.float32)  # (H, 4H)

    cost = pl.CostEstimate(
        flops=2 * T * B * H * G + 10 * T * B * H,
        transcendentals=T * (2 * B * G + B * H),
        bytes_accessed=4 * (B * T * G + H * G + B * T * H),
    )

    out_flat = pl.pallas_call(
        _lstm_recurrence_kernel,
        out_shape=jax.ShapeDtypeStruct((B, T * H), jnp.float32),
        grid=(1,),
        in_specs=[
            pl.BlockSpec((B, T, G), lambda i: (0, 0, 0)),
            pl.BlockSpec((H, G), lambda i: (0, 0)),
        ],
        out_specs=pl.BlockSpec((B, T * H), lambda i: (0, 0)),
        compiler_params=pltpu.CompilerParams(
            dimension_semantics=("arbitrary",),  # single sequential invocation
        ),
        cost_estimate=cost,
    )(gates_x, whh_t)

    # (B, T*H) -> (B, T, H): pure row-major reshape, no transpose / data movement.
    return out_flat.reshape(B, T, H)


def lstm_forward_ref(obs, w_ih, w_hh, b_ih, b_hh, obs_shape):
    """Pure-JAX reference (matches torch.nn.LSTM semantics, zero init state)."""
    obs = jnp.reshape(obs, (-1,) + tuple(obs_shape)).astype(jnp.float32)
    B, T, D = obs.shape
    H = w_hh.shape[1]

    def step(carry, x_t):
        h, c = carry
        gates = x_t @ w_ih.T + b_ih + h @ w_hh.T + b_hh
        i, f, g, o = jnp.split(gates, 4, axis=-1)
        i = jax.nn.sigmoid(i)
        f = jax.nn.sigmoid(f)
        g = jnp.tanh(g)
        o = jax.nn.sigmoid(o)
        c = f * c + i * g
        h = o * jnp.tanh(c)
        return (h, c), h

    init = (jnp.zeros((B, H), jnp.float32), jnp.zeros((B, H), jnp.float32))
    _, hs = jax.lax.scan(step, init, jnp.swapaxes(obs, 0, 1))
    return jnp.swapaxes(hs, 0, 1)


if __name__ == "__main__":
    # observation_space.shape = (T, D) with T == D so that
    # input_size = observation_space.shape[0] is consistent with batch_first input.
    T, D = 8, 8
    obs_shape = (T, D)
    features_dim = 32   # H
    batch = 2

    key = jax.random.PRNGKey(0)
    k_obs, k_wih, k_whh, k_bih, k_bhh = jax.random.split(key, 5)

    # Deterministic parameter init, matching nn.LSTM's U(-1/sqrt(H), 1/sqrt(H)).
    H = features_dim
    bound = 1.0 / math.sqrt(H)
    w_ih = jax.random.uniform(k_wih, (4 * H, D), jnp.float32, -bound, bound)
    w_hh = jax.random.uniform(k_whh, (4 * H, H), jnp.float32, -bound, bound)
    b_ih = jax.random.uniform(k_bih, (4 * H,), jnp.float32, -bound, bound)
    b_hh = jax.random.uniform(k_bhh, (4 * H,), jnp.float32, -bound, bound)

    obs = jax.random.normal(k_obs, (batch, T, D), jnp.float32)

    fwd = jax.jit(lstm_forward_pallas, static_argnums=(5,))
    h_lstm = jax.block_until_ready(fwd(obs, w_ih, w_hh, b_ih, b_hh, obs_shape))

    h_ref = lstm_forward_ref(obs, w_ih, w_hh, b_ih, b_hh, obs_shape)
    np.testing.assert_allclose(np.asarray(h_lstm), np.asarray(h_ref),
                               rtol=1e-5, atol=1e-5)
    assert h_lstm.shape == (batch, T, features_dim)

    # TODO(synk): lstm_dropout / multi-layer stacking not exercised (defaults:
    # lstm_layers=1, dropout=0.0 — dropout is a no-op for a 1-layer LSTM anyway).
    print("KERNEL_OK")
</pallas_src>

<mosaic_0001>
module attributes {stable_mosaic.version = 11 : i64} {
  func.func @_lstm_recurrence_kernel(%arg0: i32, %arg1: memref<2x8x128xf32, #tpu.memory_space<vmem>>, %arg2: memref<32x128xf32, #tpu.memory_space<vmem>>, %arg3: memref<2x256xf32, #tpu.memory_space<vmem>>) attributes {dimension_semantics = [#tpu.dimension_semantics<arbitrary>], iteration_bounds = array<i64: 1>, scalar_prefetch = 0 : i64, scratch_operands = 0 : i64, tpu.core_type = #tpu.core_type<tc>, window_params = [{pipeline_mode = #tpu.pipeline_mode<synchronous>, transform_indices = @transform_0, window_bounds = array<i64: 2, 8, 128>}, {pipeline_mode = #tpu.pipeline_mode<synchronous>, transform_indices = @transform_1, window_bounds = array<i64: 32, 128>}, {pipeline_mode = #tpu.pipeline_mode<synchronous>, transform_indices = @transform_2, window_bounds = array<i64: 2, 256>}]} {
    %c0 = arith.constant 0 : index
    %c0_0 = arith.constant 0 : index
    %c0_1 = arith.constant 0 : index
    %0 = vector.load %arg1[%c0, %c0_0, %c0_1] : memref<2x8x128xf32, #tpu.memory_space<vmem>>, vector<2x8x128xf32>
    %c0_2 = arith.constant 0 : index
    %c0_3 = arith.constant 0 : index
    %1 = vector.load %arg2[%c0_2, %c0_3] : memref<32x128xf32, #tpu.memory_space<vmem>>, vector<32x128xf32>
    %cst = arith.constant 0.000000e+00 : f32
    %2 = vector.broadcast %cst : f32 to vector<2x32xf32>
    %cst_4 = arith.constant 0.000000e+00 : f32
    %3 = vector.broadcast %cst_4 : f32 to vector<2x32xf32>
    %4 = vector.extract_strided_slice %0 {offsets = [0, 0, 0], sizes = [2, 1, 128], strides = [1, 1, 1]} : vector<2x8x128xf32> to vector<2x1x128xf32>
    %5 = vector.shape_cast %4 : vector<2x1x128xf32> to vector<2x128xf32>
    %cst_5 = arith.constant dense<0.000000e+00> : vector<2x128xf32>
    %6 = tpu.matmul %2, %1, %cst_5 {dimension_numbers = #tpu.dot_dimension_numbers<[1], [0], [0], [1], [0, 0, 1, 1], [], []>} : vector<2x32xf32>, vector<32x128xf32>, vector<2x128xf32> -> vector<2x128xf32>
    %7 = arith.addf %5, %6 : vector<2x128xf32>
    %8 = arith.negf %7 : vector<2x128xf32>
    %9 = math.exp %8 : vector<2x128xf32>
    %cst_6 = arith.constant 1.000000e+00 : f32
    %10 = vector.broadcast %cst_6 : f32 to vector<2x128xf32>
    %11 = arith.addf %10, %9 : vector<2x128xf32>
    %12 = arith.divf %10, %11 : vector<2x128xf32>
    %13 = math.tanh %7 : vector<2x128xf32>
    %14 = vector.extract_strided_slice %12 {offsets = [0, 0], sizes = [2, 32], strides = [1, 1]} : vector<2x128xf32> to vector<2x32xf32>
    %15 = vector.extract_strided_slice %12 {offsets = [0, 32], sizes = [2, 32], strides = [1, 1]} : vector<2x128xf32> to vector<2x32xf32>
    %16 = vector.extract_strided_slice %13 {offsets = [0, 64], sizes = [2, 32], strides = [1, 1]} : vector<2x128xf32> to vector<2x32xf32>
    %17 = vector.extract_strided_slice %12 {offsets = [0, 96], sizes = [2, 32], strides = [1, 1]} : vector<2x128xf32> to vector<2x32xf32>
    %18 = arith.mulf %15, %3 : vector<2x32xf32>
    %19 = arith.mulf %14, %16 : vector<2x32xf32>
    %20 = arith.addf %18, %19 : vector<2x32xf32>
    %21 = math.tanh %20 : vector<2x32xf32>
    %22 = arith.mulf %17, %21 : vector<2x32xf32>
    %c0_7 = arith.constant 0 : index
    %c0_8 = arith.constant 0 : index
    %23 = vector.load %arg3[%c0_7, %c0_8] : memref<2x256xf32, #tpu.memory_space<vmem>>, vector<2x32xf32>
    tpu.vector_store %arg3[%c0_7, %c0_8], %22 {strides = array<i32>} : memref<2x256xf32, #tpu.memory_space<vmem>>, vector<2x32xf32>,
    %24 = vector.extract_strided_slice %0 {offsets = [0, 1, 0], sizes = [2, 1, 128], strides = [1, 1, 1]} : vector<2x8x128xf32> to vector<2x1x128xf32>
    %25 = vector.shape_cast %24 : vector<2x1x128xf32> to vector<2x128xf32>
    %cst_9 = arith.constant dense<0.000000e+00> : vector<2x128xf32>
    %26 = tpu.matmul %22, %1, %cst_9 {dimension_numbers = #tpu.dot_dimension_numbers<[1], [0], [0], [1], [0, 0, 1, 1], [], []>} : vector<2x32xf32>, vector<32x128xf32>, vector<2x128xf32> -> vector<2x128xf32>
    %27 = arith.addf %25, %26 : vector<2x128xf32>
    %28 = arith.negf %27 : vector<2x128xf32>
    %29 = math.exp %28 : vector<2x128xf32>
    %cst_10 = arith.constant 1.000000e+00 : f32
    %30 = vector.broadcast %cst_10 : f32 to vector<2x128xf32>
    %31 = arith.addf %30, %29 : vector<2x128xf32>
    %32 = arith.divf %30, %31 : vector<2x128xf32>
    %33 = math.tanh %27 : vector<2x128xf32>
    %34 = vector.extract_strided_slice %32 {offsets = [0, 0], sizes = [2, 32], strides = [1, 1]} : vector<2x128xf32> to vector<2x32xf32>
    %35 = vector.extract_strided_slice %32 {offsets = [0, 32], sizes = [2, 32], strides = [1, 1]} : vector<2x128xf32> to vector<2x32xf32>
    %36 = vector.extract_strided_slice %33 {offsets = [0, 64], sizes = [2, 32], strides = [1, 1]} : vector<2x128xf32> to vector<2x32xf32>
    %37 = vector.extract_strided_slice %32 {offsets = [0, 96], sizes = [2, 32], strides = [1, 1]} : vector<2x128xf32> to vector<2x32xf32>
    %38 = arith.mulf %35, %20 : vector<2x32xf32>
    %39 = arith.mulf %34, %36 : vector<2x32xf32>
    %40 = arith.addf %38, %39 : vector<2x32xf32>
    %41 = math.tanh %40 : vector<2x32xf32>
    %42 = arith.mulf %37, %41 : vector<2x32xf32>
    %c0_11 = arith.constant 0 : index
    %c32 = arith.constant 32 : index
    %43 = vector.load %arg3[%c0_11, %c32] : memref<2x256xf32, #tpu.memory_space<vmem>>, vector<2x32xf32>
    tpu.vector_store %arg3[%c0_11, %c32], %42 {strides = array<i32>} : memref<2x256xf32, #tpu.memory_space<vmem>>, vector<2x32xf32>,
    %44 = vector.extract_strided_slice %0 {offsets = [0, 2, 0], sizes = [2, 1, 128], strides = [1, 1, 1]} : vector<2x8x128xf32> to vector<2x1x128xf32>
    %45 = vector.shape_cast %44 : vector<2x1x128xf32> to vector<2x128xf32>
    %cst_12 = arith.constant dense<0.000000e+00> : vector<2x128xf32>
    %46 = tpu.matmul %42, %1, %cst_12 {dimension_numbers = #tpu.dot_dimension_numbers<[1], [0], [0], [1], [0, 0, 1, 1], [], []>} : vector<2x32xf32>, vector<32x128xf32>, vector<2x128xf32> -> vector<2x128xf32>
    %47 = arith.addf %45, %46 : vector<2x128xf32>
    %48 = arith.negf %47 : vector<2x128xf32>
    %49 = math.exp %48 : vector<2x128xf32>
    %cst_13 = arith.constant 1.000000e+00 : f32
    %50 = vector.broadcast %cst_13 : f32 to vector<2x128xf32>
    %51 = arith.addf %50, %49 : vector<2x128xf32>
    %52 = arith.divf %50, %51 : vector<2x128xf32>
    %53 = math.tanh %47 : vector<2x128xf32>
    %54 = vector.extract_strided_slice %52 {offsets = [0, 0], sizes = [2, 32], strides = [1, 1]} : vector<2x128xf32> to vector<2x32xf32>
    %55 = vector.extract_strided_slice %52 {offsets = [0, 32], sizes = [2, 32], strides = [1, 1]} : vector<2x128xf32> to vector<2x32xf32>
    %56 = vector.extract_strided_slice %53 {offsets = [0, 64], sizes = [2, 32], strides = [1, 1]} : vector<2x128xf32> to vector<2x32xf32>
    %57 = vector.extract_strided_slice %52 {offsets = [0, 96], sizes = [2, 32], strides = [1, 1]} : vector<2x128xf32> to vector<2x32xf32>
    %58 = arith.mulf %55, %40 : vector<2x32xf32>
    %59 = arith.mulf %54, %56 : vector<2x32xf32>
    %60 = arith.addf %58, %59 : vector<2x32xf32>
    %61 = math.tanh %60 : vector<2x32xf32>
    %62 = arith.mulf %57, %61 : vector<2x32xf32>
    %c0_14 = arith.constant 0 : index
    %c64 = arith.constant 64 : index
    %63 = vector.load %arg3[%c0_14, %c64] : memref<2x256xf32, #tpu.memory_space<vmem>>, vector<2x32xf32>
    tpu.vector_store %arg3[%c0_14, %c64], %62 {strides = array<i32>} : memref<2x256xf32, #tpu.memory_space<vmem>>, vector<2x32xf32>,
    %64 = vector.extract_strided_slice %0 {offsets = [0, 3, 0], sizes = [2, 1, 128], strides = [1, 1, 1]} : vector<2x8x128xf32> to vector<2x1x128xf32>
    %65 = vector.shape_cast %64 : vector<2x1x128xf32> to vector<2x128xf32>
    %cst_15 = arith.constant dense<0.000000e+00> : vector<2x128xf32>
    %66 = tpu.matmul %62, %1, %cst_15 {dimension_numbers = #tpu.dot_dimension_numbers<[1], [0], [0], [1], [0, 0, 1, 1], [], []>} : vector<2x32xf32>, vector<32x128xf32>, vector<2x128xf32> -> vector<2x128xf32>
    %67 = arith.addf %65, %66 : vector<2x128xf32>
    %68 = arith.negf %67 : vector<2x128xf32>
    %69 = math.exp %68 : vector<2x128xf32>
    %cst_16 = arith.constant 1.000000e+00 : f32
    %70 = vector.broadcast %cst_16 : f32 to vector<2x128xf32>
    %71 = arith.addf %70, %69 : vector<2x128xf32>
    %72 = arith.divf %70, %71 : vector<2x128xf32>
    %73 = math.tanh %67 : vector<2x128xf32>
    %74 = vector.extract_strided_slice %72 {offsets = [0, 0], sizes = [2, 32], strides = [1, 1]} : vector<2x128xf32> to vector<2x32xf32>
    %75 = vector.extract_strided_slice %72 {offsets = [0, 32], sizes = [2, 32], strides = [1, 1]} : vector<2x128xf32> to vector<2x32xf32>
    %76 = vector.extract_strided_slice %73 {offsets = [0, 64], sizes = [2, 32], strides = [1, 1]} : vector<2x128xf32> to vector<2x32xf32>
    %77 = vector.extract_strided_slice %72 {offsets = [0, 96], sizes = [2, 32], strides = [1, 1]} : vector<2x128xf32> to vector<2x32xf32>
    %78 = arith.mulf %75, %60 : vector<2x32xf32>
    %79 = arith.mulf %74, %76 : vector<2x32xf32>
    %80 = arith.addf %78, %79 : vector<2x32xf32>
    %81 = math.tanh %80 : vector<2x32xf32>
    %82 = arith.mulf %77, %81 : vector<2x32xf32>
    %c0_17 = arith.constant 0 : index
    %c96 = arith.constant 96 : index
    %83 = vector.load %arg3[%c0_17, %c96] : memref<2x256xf32, #tpu.memory_space<vmem>>, vector<2x32xf32>
    tpu.vector_store %arg3[%c0_17, %c96], %82 {strides = array<i32>} : memref<2x256xf32, #tpu.memory_space<vmem>>, vector<2x32xf32>,
    %84 = vector.extract_strided_slice %0 {offsets = [0, 4, 0], sizes = [2, 1, 128], strides = [1, 1, 1]} : vector<2x8x128xf32> to vector<2x1x128xf32>
    %85 = vector.shape_cast %84 : vector<2x1x128xf32> to vector<2x128xf32>
    %cst_18 = arith.constant dense<0.000000e+00> : vector<2x128xf32>
    %86 = tpu.matmul %82, %1, %cst_18 {dimension_numbers = #tpu.dot_dimension_numbers<[1], [0], [0], [1], [0, 0, 1, 1], [], []>} : vector<2x32xf32>, vector<32x128xf32>, vector<2x128xf32> -> vector<2x128xf32>
    %87 = arith.addf %85, %86 : vector<2x128xf32>
    %88 = arith.negf %87 : vector<2x128xf32>
    %89 = math.exp %88 : vector<2x128xf32>
    %cst_19 = arith.constant 1.000000e+00 : f32
    %90 = vector.broadcast %cst_19 : f32 to vector<2x128xf32>
    %91 = arith.addf %90, %89 : vector<2x128xf32>
    %92 = arith.divf %90, %91 : vector<2x128xf32>
    %93 = math.tanh %87 : vector<2x128xf32>
    %94 = vector.extract_strided_slice %92 {offsets = [0, 0], sizes = [2, 32], strides = [1, 1]} : vector<2x128xf32> to vector<2x32xf32>
    %95 = vector.extract_strided_slice %92 {offsets = [0, 32], sizes = [2, 32], strides = [1, 1]} : vector<2x128xf32> to vector<2x32xf32>
    %96 = vector.extract_strided_slice %93 {offsets = [0, 64], sizes = [2, 32], strides = [1, 1]} : vector<2x128xf32> to vector<2x32xf32>
    %97 = vector.extract_strided_slice %92 {offsets = [0, 96], sizes = [2, 32], strides = [1, 1]} : vector<2x128xf32> to vector<2x32xf32>
    %98 = arith.mulf %95, %80 : vector<2x32xf32>
    %99 = arith.mulf %94, %96 : vector<2x32xf32>
    %100 = arith.addf %98, %99 : vector<2x32xf32>
    %101 = math.tanh %100 : vector<2x32xf32>
    %102 = arith.mulf %97, %101 : vector<2x32xf32>
    %c0_20 = arith.constant 0 : index
    %c128 = arith.constant 128 : index
    %103 = vector.load %arg3[%c0_20, %c128] : memref<2x256xf32, #tpu.memory_space<vmem>>, vector<2x32xf32>
    tpu.vector_store %arg3[%c0_20, %c128], %102 {strides = array<i32>} : memref<2x256xf32, #tpu.memory_space<vmem>>, vector<2x32xf32>,
    %104 = vector.extract_strided_slice %0 {offsets = [0, 5, 0], sizes = [2, 1, 128], strides = [1, 1, 1]} : vector<2x8x128xf32> to vector<2x1x128xf32>
    %105 = vector.shape_cast %104 : vector<2x1x128xf32> to vector<2x128xf32>
    %cst_21 = arith.constant dense<0.000000e+00> : vector<2x128xf32>
    %106 = tpu.matmul %102, %1, %cst_21 {dimension_numbers = #tpu.dot_dimension_numbers<[1], [0], [0], [1], [0, 0, 1, 1], [], []>} : vector<2x32xf32>, vector<32x128xf32>, vector<2x128xf32> -> vector<2x128xf32>
    %107 = arith.addf %105, %106 : vector<2x128xf32>
    %108 = arith.negf %107 : vector<2x128xf32>
    %109 = math.exp %108 : vector<2x128xf32>
    %cst_22 = arith.constant 1.000000e+00 : f32
    %110 = vector.broadcast %cst_22 : f32 to vector<2x128xf32>
    %111 = arith.addf %110, %109 : vector<2x128xf32>
    %112 = arith.divf %110, %111 : vector<2x128xf32>
    %113 = math.tanh %107 : vector<2x128xf32>
    %114 = vector.extract_strided_slice %112 {offsets = [0, 0], sizes = [2, 32], strides = [1, 1]} : vector<2x128xf32> to vector<2x32xf32>
    %115 = vector.extract_strided_slice %112 {offsets = [0, 32], sizes = [2, 32], strides = [1, 1]} : vector<2x128xf32> to vector<2x32xf32>
    %116 = vector.extract_strided_slice %113 {offsets = [0, 64], sizes = [2, 32], strides = [1, 1]} : vector<2x128xf32> to vector<2x32xf32>
    %117 = vector.extract_strided_slice %112 {offsets = [0, 96], sizes = [2, 32], strides = [1, 1]} : vector<2x128xf32> to vector<2x32xf32>
    %118 = arith.mulf %115, %100 : vector<2x32xf32>
    %119 = arith.mulf %114, %116 : vector<2x32xf32>
    %120 = arith.addf %118, %119 : vector<2x32xf32>
    %121 = math.tanh %120 : vector<2x32xf32>
    %122 = arith.mulf %117, %121 : vector<2x32xf32>
    %c0_23 = arith.constant 0 : index
    %c160 = arith.constant 160 : index
    %123 = vector.load %arg3[%c0_23, %c160] : memref<2x256xf32, #tpu.memory_space<vmem>>, vector<2x32xf32>
    tpu.vector_store %arg3[%c0_23, %c160], %122 {strides = array<i32>} : memref<2x256xf32, #tpu.memory_space<vmem>>, vector<2x32xf32>,
    %124 = vector.extract_strided_slice %0 {offsets = [0, 6, 0], sizes = [2, 1, 128], strides = [1, 1, 1]} : vector<2x8x128xf32> to vector<2x1x128xf32>
    %125 = vector.shape_cast %124 : vector<2x1x128xf32> to vector<2x128xf32>
    %cst_24 = arith.constant dense<0.000000e+00> : vector<2x128xf32>
    %126 = tpu.matmul %122, %1, %cst_24 {dimension_numbers = #tpu.dot_dimension_numbers<[1], [0], [0], [1], [0, 0, 1, 1], [], []>} : vector<2x32xf32>, vector<32x128xf32>, vector<2x128xf32> -> vector<2x128xf32>
    %127 = arith.addf %125, %126 : vector<2x128xf32>
    %128 = arith.negf %127 : vector<2x128xf32>
    %129 = math.exp %128 : vector<2x128xf32>
    %cst_25 = arith.constant 1.000000e+00 : f32
    %130 = vector.broadcast %cst_25 : f32 to vector<2x128xf32>
    %131 = arith.addf %130, %129 : vector<2x128xf32>
    %132 = arith.divf %130, %131 : vector<2x128xf32>
    %133 = math.tanh %127 : vector<2x128xf32>
    %134 = vector.extract_strided_slice %132 {offsets = [0, 0], sizes = [2, 32], strides = [1, 1]} : vector<2x128xf32> to vector<2x32xf32>
    %135 = vector.extract_strided_slice %132 {offsets = [0, 32], sizes = [2, 32], strides = [1, 1]} : vector<2x128xf32> to vector<2x32xf32>
    %136 = vector.extract_strided_slice %133 {offsets = [0, 64], sizes = [2, 32], strides = [1, 1]} : vector<2x128xf32> to vector<2x32xf32>
    %137 = vector.extract_strided_slice %132 {offsets = [0, 96], sizes = [2, 32], strides = [1, 1]} : vector<2x128xf32> to vector<2x32xf32>
    %138 = arith.mulf %135, %120 : vector<2x32xf32>
    %139 = arith.mulf %134, %136 : vector<2x32xf32>
    %140 = arith.addf %138, %139 : vector<2x32xf32>
    %141 = math.tanh %140 : vector<2x32xf32>
    %142 = arith.mulf %137, %141 : vector<2x32xf32>
    %c0_26 = arith.constant 0 : index
    %c192 = arith.constant 192 : index
    %143 = vector.load %arg3[%c0_26, %c192] : memref<2x256xf32, #tpu.memory_space<vmem>>, vector<2x32xf32>
    tpu.vector_store %arg3[%c0_26, %c192], %142 {strides = array<i32>} : memref<2x256xf32, #tpu.memory_space<vmem>>, vector<2x32xf32>,
    %144 = vector.extract_strided_slice %0 {offsets = [0, 7, 0], sizes = [2, 1, 128], strides = [1, 1, 1]} : vector<2x8x128xf32> to vector<2x1x128xf32>
    %145 = vector.shape_cast %144 : vector<2x1x128xf32> to vector<2x128xf32>
    %cst_27 = arith.constant dense<0.000000e+00> : vector<2x128xf32>
    %146 = tpu.matmul %142, %1, %cst_27 {dimension_numbers = #tpu.dot_dimension_numbers<[1], [0], [0], [1], [0, 0, 1, 1], [], []>} : vector<2x32xf32>, vector<32x128xf32>, vector<2x128xf32> -> vector<2x128xf32>
    %147 = arith.addf %145, %146 : vector<2x128xf32>
    %148 = arith.negf %147 : vector<2x128xf32>
    %149 = math.exp %148 : vector<2x128xf32>
    %cst_28 = arith.constant 1.000000e+00 : f32
    %150 = vector.broadcast %cst_28 : f32 to vector<2x128xf32>
    %151 = arith.addf %150, %149 : vector<2x128xf32>
    %152 = arith.divf %150, %151 : vector<2x128xf32>
    %153 = math.tanh %147 : vector<2x128xf32>
    %154 = vector.extract_strided_slice %152 {offsets = [0, 0], sizes = [2, 32], strides = [1, 1]} : vector<2x128xf32> to vector<2x32xf32>
    %155 = vector.extract_strided_slice %152 {offsets = [0, 32], sizes = [2, 32], strides = [1, 1]} : vector<2x128xf32> to vector<2x32xf32>
    %156 = vector.extract_strided_slice %153 {offsets = [0, 64], sizes = [2, 32], strides = [1, 1]} : vector<2x128xf32> to vector<2x32xf32>
    %157 = vector.extract_strided_slice %152 {offsets = [0, 96], sizes = [2, 32], strides = [1, 1]} : vector<2x128xf32> to vector<2x32xf32>
    %158 = arith.mulf %155, %140 : vector<2x32xf32>
    %159 = arith.mulf %154, %156 : vector<2x32xf32>
    %160 = arith.addf %158, %159 : vector<2x32xf32>
    %161 = math.tanh %160 : vector<2x32xf32>
    %162 = arith.mulf %157, %161 : vector<2x32xf32>
    %c0_29 = arith.constant 0 : index
    %c224 = arith.constant 224 : index
    %163 = vector.load %arg3[%c0_29, %c224] : memref<2x256xf32, #tpu.memory_space<vmem>>, vector<2x32xf32>
    tpu.vector_store %arg3[%c0_29, %c224], %162 {strides = array<i32>} : memref<2x256xf32, #tpu.memory_space<vmem>>, vector<2x32xf32>,
    return
  }
  func.func @transform_0(%arg0: i32) -> (i32, i32, i32) {
    %c0_i32 = arith.constant 0 : i32
    %c0_i32_0 = arith.constant 0 : i32
    %c0_i32_1 = arith.constant 0 : i32
    %c0_i32_2 = arith.constant 0 : i32
    return %c0_i32, %c0_i32_0, %c0_i32_1 : i32, i32, i32
  }
  func.func @transform_1(%arg0: i32) -> (i32, i32) {
    %c0_i32 = arith.constant 0 : i32
    %c0_i32_0 = arith.constant 0 : i32
    %c0_i32_1 = arith.constant 0 : i32
    return %c0_i32, %c0_i32_0 : i32, i32
  }
  func.func @transform_2(%arg0: i32) -> (i32, i32) {
    %c0_i32 = arith.constant 0 : i32
    %c0_i32_0 = arith.constant 0 : i32
    %c0_i32_1 = arith.constant 0 : i32
    return %c0_i32, %c0_i32_0 : i32, i32
  }
}

</mosaic_0001>

<llo_original>
// kernel: lstm_forward_pallas.1
$region0: #{lstm_forward_pallas.1}
  #allocation0 [shape = 'u32[]', space=smem, size = 0x4, offset = 0x4, fixed_abs, tag = 'smem constant byte address 0x4 - core index']
  #allocation1 [shape = 'u32[144,128]{1,0:T(1,128)}', space=vmem, size = 0x12000, scoped, tag = 'internal scratch']
  %s0 = inlined_call_operand.vmem [shape: f32[2,8,128], index: 0, kind: input, shape index: {}]
  %s1 = inlined_call_operand.vmem [shape: f32[32,128], index: 1, kind: input, shape index: {}]
  %s2 = inlined_call_operand.vmem [shape: f32[2,256], index: 2, kind: output, shape index: {}]
  %s3 = sld [smem:[#allocation0]]
  $region18: #{lstm_forward_pallas.1} parent=0
    _
  %s5 = ssub.s32 1, %s3
  %s6 = scalar_select 0, %s5, %s3
  // Predicated region
  $region2: #{lstm_forward_pallas.1} parent=0 // pred_check
    _
  $region3: #{lstm_forward_pallas.1} parent=0 // pred_check_branch
    %8 = sbr.rel (0) target = $region5
  $region4: #{lstm_forward_pallas.1} parent=0 // pred_region
    _
  $region5: #{lstm_forward_pallas.1} parent=0 // pred_fallthru
    _
  // Predicated region
  $region6: #{lstm_forward_pallas.1} parent=0 // pred_check
    _
  $region7: #{lstm_forward_pallas.1} parent=0 // pred_check_branch
    %10 = sbr.rel (0) target = $region9
  $region8: #{lstm_forward_pallas.1} parent=0 // pred_region
    _
  $region9: #{lstm_forward_pallas.1} parent=0 // pred_fallthru
    _
  %v11 = vld [vmem:[%s0] sm:$0xff]
  %v12 = vld [vmem:[%s0 + $0x8] sm:$0xff]
  %v13 = vld [vmem:[%s1] sm:$0xff]
  %v14 = vld [vmem:[%s1 + $0x8] sm:$0xff]
  %v15 = vld [vmem:[%s1 + $0x10] sm:$0xff]
  %v16 = vld [vmem:[%s1 + $0x18] sm:$0xff]
  %vm17 = vcmask 261120
  %v19 = vsel %vm17, 0.0, 0
  %21 = vmatprep.subr.mxu0 0.0
  %22 = vmatpush1.msra.mxu0 %v13
  %23 = vmatprep.subr.mxu0 0.0
  %24 = vmatpush1.msra.mxu0 %v14
  %25 = vmatprep.subr.mxu0 0.0
  %26 = vmatpush1.msra.mxu0 %v15
  %27 = vmatprep.subr.mxu0 0.0
  %28 = vmatpush1.msra.mxu0 %v16
  %29 = vmatprep.subr.mxu0 0.0
  %30 = vmatpush1.msra.mxu0 0.0
  %31 = vmatprep.subr.mxu0 0.0
  %32 = vmatpush1.msra.mxu0 0.0
  %33 = vmatprep.subr.mxu0 0.0
  %34 = vmatpush1.msra.mxu0 0.0
  %35 = vmatprep.subr.mxu0 0.0
  %36 = vmatpush1.msra.mxu0 0.0
  %37 = vmatprep.subr.mxu0 0.0
  %38 = vmatpush1.msra.mxu0 0.0
  %39 = vmatprep.subr.mxu0 0.0
  %40 = vmatpush1.msra.mxu0 0.0
  %41 = vmatprep.subr.mxu0 0.0
  %42 = vmatpush1.msra.mxu0 0.0
  %43 = vmatprep.subr.mxu0 0.0
  %44 = vmatpush1.msra.mxu0 0.0
  %45 = vmatprep.subr.mxu0 0.0
  %46 = vmatpush1.msra.mxu0 0.0
  %47 = vmatprep.subr.mxu0 0.0
  %48 = vmatpush1.msra.mxu0 0.0
  %49 = vmatprep.subr.mxu0 0.0
  %50 = vmatpush1.msra.mxu0 0.0
  %51 = vmatprep.subr.mxu0 0.0
  %52 = vmatpush1.msra.mxu0 0.0
  %53 = vmatprep.subr.mxu0 0.0
  %54 = vmatpush1.msra.mxu0 0.0
  %55 = vmatprep.subr.mxu0 0.0
  %56 = vmatpush1.msra.mxu0 0.0
  %57 = vmatprep.subr.mxu0 0.0
  %58 = vmatpush1.msra.mxu0 0.0
  %59 = vmatprep.subr.mxu0 0.0
  %60 = vmatpush1.msra.mxu0 0.0
  %61 = vmatprep.subr.mxu0 0.0
  %62 = vmatpush1.msra.mxu0 0.0
  %63 = vmatprep.subr.mxu0 0.0
  %64 = vmatpush1.msra.mxu0 0.0
  %65 = vmatprep.subr.mxu0 0.0
  %66 = vmatpush1.msra.mxu0 0.0
  %67 = vmatprep.subr.mxu0 0.0
  %68 = vmatpush1.msra.mxu0 0.0
  %69 = vmatprep.subr.mxu0 0.0
  %70 = vmatpush1.msra.mxu0 0.0
  %71 = vmatprep.subr.mxu0 0.0
  %72 = vmatpush1.msra.mxu0 0.0
  %73 = vmatprep.subr.mxu0 0.0
  %74 = vmatpush1.msra.mxu0 0.0
  %75 = vmatprep.subr.mxu0 0.0
  %76 = vmatpush1.msra.mxu0 0.0
  %77 = vmatprep.subr.mxu0 0.0
  %78 = vmatpush1.msra.mxu0 0.0
  %79 = vmatprep.subr.mxu0 0.0
  %80 = vmatpush1.msra.mxu0 0.0
  %81 = vmatprep.subr.mxu0 0.0
  %82 = vmatpush1.msra.mxu0 0.0
  %83 = vmatprep.subr.mxu0 0.0
  %84 = vmatpush1.msra.mxu0 0.0
  %85 = vmatprep.mubr.f32.mxu0 0.0
  %86 = vmatmul.mubr.f32.gmra.mrb[0].mxu0 %v19
  %v87 = vpop.f32.mrb[0].mxu0
  %v88 = vadd.f32 0.0, %v87
  %v89 = vpop.f32.mrb[0].mxu0
  %90 = vdwg.mxu0
  %v92 = vrot.slane %v88, 1
  %v95 = vadd.f32 %v11, %v88
  %v96 = vadd.f32 %v12, %v92
  %v97 = vxor.u32 %v95, 2147483648
  %v98 = vxor.u32 %v96, 2147483648
  %v99 = vmul.f32 %v97, 1.442695
  %v100 = vpow.pop %v99
  %v101 = vmul.f32 %v98, 1.442695
  %v102 = vpow.pop %v101
  %v103 = vadd.f32 %v100, 1.0
  %v104 = vadd.f32 %v102, 1.0
  %v105 = vrcp.pop %v103
  %v106 = vmul.f32 1.0, %v105
  %v107 = vrcp.pop %v104
  %v108 = vmul.f32 1.0, %v107
  %v109 = vtanh.pop %v95
  %v110 = vtanh.pop %v96
  %v111 = vmul.f32 %v106, 0.0
  %v112 = vmul.f32 %v108, 0.0
  %115 = vrot.lane.b32.xlu0 %v109, 64
  %v116 = vpop.permute.xlu0 %115
  %117 = vrot.lane.b32.xlu0 %v110, 64
  %v118 = vpop.permute.xlu0 %117
  %v121 = vmul.f32 %v106, %v116
  %v122 = vmul.f32 %v108, %v118
  %125 = vrot.lane.b32.xlu0 %v121, 32
  %v126 = vpop.permute.xlu0 %125
  %127 = vrot.lane.b32.xlu0 %v122, 32
  %v128 = vpop.permute.xlu0 %127
  %v131 = vadd.f32 %v111, %v126
  %v132 = vadd.f32 %v112, %v128
  %v133 = vtanh.pop %v131
  %v134 = vtanh.pop %v132
  %137 = vrot.lane.b32.xlu0 %v133, 64
  %v138 = vpop.permute.xlu0 %137
  %139 = vrot.lane.b32.xlu0 %v134, 64
  %v140 = vpop.permute.xlu0 %139
  %v143 = vmul.f32 %v106, %v138
  %v144 = vmul.f32 %v108, %v140
  %v148 = vunpack.c.l.s4 1983009808
  %v149 = vunpack.c.0.s8 %v148
  %v150 = vlaneseq
  %v151 = vshrl.u32 %v150, 7
  %v152 = vsub.s32 %v149, %v151
  %v153 = vrot.slane %v143, %v152
  %v155 = vunpack.c.l.s4 1983009808
  %v156 = vunpack.c.0.s8 %v155
  %v157 = vlaneseq
  %v158 = vshrl.u32 %v157, 7
  %v159 = vsub.s32 %v156, %v158
  %v160 = vrot.slane %v144, %v159
  %vm161 = vcmask 1044484
  %v162 = vsel %vm161, %v153, %v153
  %vm163 = vcmask 1046534
  %v164 = vsel %vm163, %v153, %v162
  %v165 = vrot.slane %v160, 7
  %vm166 = vcmask 1041409
  %v167 = vsel %vm166, %v165, %v164
  %vm168 = vcmask 1043459
  %v169 = vsel %vm168, %v165, %v167
  %vm170 = vcmask 1045509
  %v171 = vsel %vm170, %v165, %v169
  %vm172 = vcmask 1047559
  %v173 = vsel %vm172, %v165, %v171
  %174 = vrot.lane.b32.xlu0 %v173, 32
  %v175 = vpop.permute.xlu0 %174
  %vm177 = vcmask 254976
  %178 = vst.msk [vmem:[%s2] sm:$0x3] %vm177, %v175
  %v179 = vrot.slane %v144, 7
  %v180 = vsel %vm166, %v179, %v143
  %181 = vrot.lane.b32.xlu0 %v180, 32
  %v182 = vpop.permute.xlu0 %181
  %v183 = vsel %vm17, %v182, 0
  %185 = vmatprep.subr.mxu0 0.0
  %186 = vmatpush1.msra.mxu0 %v13
  %187 = vmatprep.subr.mxu0 0.0
  %188 = vmatpush1.msra.mxu0 %v14
  %189 = vmatprep.subr.mxu0 0.0
  %190 = vmatpush1.msra.mxu0 %v15
  %191 = vmatprep.subr.mxu0 0.0
  %192 = vmatpush1.msra.mxu0 %v16
  %193 = vmatprep.subr.mxu0 0.0
  %194 = vmatpush1.msra.mxu0 0.0
  %195 = vmatprep.subr.mxu0 0.0
  %196 = vmatpush1.msra.mxu0 0.0
  %197 = vmatprep.subr.mxu0 0.0
  %198 = vmatpush1.msra.mxu0 0.0
  %199 = vmatprep.subr.mxu0 0.0
  %200 = vmatpush1.msra.mxu0 0.0
  %201 = vmatprep.subr.mxu0 0.0
  %202 = vmatpush1.msra.mxu0 0.0
  %203 = vmatprep.subr.mxu0 0.0
  %204 = vmatpush1.msra.mxu0 0.0
  %205 = vmatprep.subr.mxu0 0.0
  %206 = vmatpush1.msra.mxu0 0.0
  %207 = vmatprep.subr.mxu0 0.0
  %208 = vmatpush1.msra.mxu0 0.0
  %209 = vmatprep.subr.mxu0 0.0
  %210 = vmatpush1.msra.mxu0 0.0
  %211 = vmatprep.subr.mxu0 0.0
  %212 = vmatpush1.msra.mxu0 0.0
  %213 = vmatprep.subr.mxu0 0.0
  %214 = vmatpush1.msra.mxu0 0.0
  %215 = vmatprep.subr.mxu0 0.0
  %216 = vmatpush1.msra.mxu0 0.0
  %217 = vmatprep.subr.mxu0 0.0
  %218 = vmatpush1.msra.mxu0 0.0
  %219 = vmatprep.subr.mxu0 0.0
  %220 = vmatpush1.msra.mxu0 0.0
  %221 = vmatprep.subr.mxu0 0.0
  %222 = vmatpush1.msra.mxu0 0.0
  %223 = vmatprep.subr.mxu0 0.0
  %224 = vmatpush1.msra.mxu0 0.0
  %225 = vmatprep.subr.mxu0 0.0
  %226 = vmatpush1.msra.mxu0 0.0
  %227 = vmatprep.subr.mxu0 0.0
  %228 = vmatpush1.msra.mxu0 0.0
  %229 = vmatprep.subr.mxu0 0.0
  %230 = vmatpush1.msra.mxu0 0.0
  %231 = vmatprep.subr.mxu0 0.0
  %232 = vmatpush1.msra.mxu0 0.0
  %233 = vmatprep.subr.mxu0 0.0
  %234 = vmatpush1.msra.mxu0 0.0
  %235 = vmatprep.subr.mxu0 0.0
  %236 = vmatpush1.msra.mxu0 0.0
  %237 = vmatprep.subr.mxu0 0.0
  %238 = vmatpush1.msra.mxu0 0.0
  %239 = vmatprep.subr.mxu0 0.0
  %240 = vmatpush1.msra.mxu0 0.0
  %241 = vmatprep.subr.mxu0 0.0
  %242 = vmatpush1.msra.mxu0 0.0
  %243 = vmatprep.subr.mxu0 0.0
  %244 = vmatpush1.msra.mxu0 0.0
  %245 = vmatprep.subr.mxu0 0.0
  %246 = vmatpush1.msra.mxu0 0.0
  %247 = vmatprep.subr.mxu0 0.0
  %248 = vmatpush1.msra.mxu0 0.0
  %249 = vmatprep.mubr.f32.mxu0 0.0
  %250 = vmatmul.mubr.f32.gmra.mrb[0].mxu0 %v183
  %v251 = vpop.f32.mrb[0].mxu0
  %v252 = vadd.f32 0.0, %v251
  %v253 = vpop.f32.mrb[0].mxu0
  %254 = vdwg.mxu0
  %v256 = vrot.slane %v252, 7
  %v259 = vadd.f32 %v11, %v256
  %v260 = vadd.f32 %v12, %v252
  %v261 = vxor.u32 %v259, 2147483648
  %v262 = vxor.u32 %v260, 2147483648
  %v263 = vmul.f32 %v261, 1.442695
  %v264 = vpow.pop %v263
  %v265 = vmul.f32 %v262, 1.442695
  %v266 = vpow.pop %v265
  %v267 = vadd.f32 %v264, 1.0
  %v268 = vadd.f32 %v266, 1.0
  %v269 = vrcp.pop %v267
  %v270 = vmul.f32 1.0, %v269
  %v271 = vrcp.pop %v268
  %v272 = vmul.f32 1.0, %v271
  %v273 = vtanh.pop %v259
  %v274 = vtanh.pop %v260
  %v277 = vrot.slane %v131, 7
  %v278 = vrot.slane %v132, 7
  %v281 = vmul.f32 %v270, %v277
  %v282 = vmul.f32 %v272, %v278
  %285 = vrot.lane.b32.xlu0 %v273, 64
  %v286 = vpop.permute.xlu0 %285
  %287 = vrot.lane.b32.xlu0 %v274, 64
  %v288 = vpop.permute.xlu0 %287
  %v291 = vmul.f32 %v270, %v286
  %v292 = vmul.f32 %v272, %v288
  %295 = vrot.lane.b32.xlu0 %v291, 32
  %v296 = vpop.permute.xlu0 %295
  %297 = vrot.lane.b32.xlu0 %v292, 32
  %v298 = vpop.permute.xlu0 %297
  %v301 = vadd.f32 %v281, %v296
  %v302 = vadd.f32 %v282, %v298
  %v303 = vtanh.pop %v301
  %v304 = vtanh.pop %v302
  %307 = vrot.lane.b32.xlu0 %v303, 64
  %v308 = vpop.permute.xlu0 %307
  %309 = vrot.lane.b32.xlu0 %v304, 64
  %v310 = vpop.permute.xlu0 %309
  %v313 = vmul.f32 %v270, %v308
  %v314 = vmul.f32 %v272, %v310
  %v318 = vunpack.c.l.s4 1983009808
  %v319 = vunpack.c.0.s8 %v318
  %v320 = vlaneseq
  %v321 = vshrl.u32 %v320, 7
  %v322 = vsub.s32 %v319, %v321
  %v323 = vrot.slane %v313, %v322
  %v325 = vunpack.c.l.s4 1983009808
  %v326 = vunpack.c.0.s8 %v325
  %v327 = vlaneseq
  %v328 = vshrl.u32 %v327, 7
  %v329 = vsub.s32 %v326, %v328
  %v330 = vrot.slane %v314, %v329
  %v331 = vrot.slane %v323, 1
  %v332 = vsel %vm161, %v331, %v331
  %v333 = vsel %vm163, %v331, %v332
  %v334 = vsel %vm166, %v330, %v333
  %v335 = vsel %vm168, %v330, %v334
  %v336 = vsel %vm170, %v330, %v335
  %v337 = vsel %vm172, %v330, %v336
  %338 = vrot.lane.b32.xlu0 %v337, 64
  %v339 = vpop.permute.xlu0 %338
  %vm341 = vcmask 517376
  %342 = vst.msk [vmem:[%s2] sm:$0x3] %vm341, %v339
  %v343 = vrot.slane %v313, 1
  %v344 = vsel %vm166, %v314, %v343
  %345 = vrot.lane.b32.xlu0 %v344, 32
  %v346 = vpop.permute.xlu0 %345
  %v347 = vsel %vm17, %v346, 0
  %349 = vmatprep.subr.mxu0 0.0
  %350 = vmatpush1.msra.mxu0 %v13
  %351 = vmatprep.subr.mxu0 0.0
  %352 = vmatpush1.msra.mxu0 %v14
  %353 = vmatprep.subr.mxu0 0.0
  %354 = vmatpush1.msra.mxu0 %v15
  %355 = vmatprep.subr.mxu0 0.0
  %356 = vmatpush1.msra.mxu0 %v16
  %357 = vmatprep.subr.mxu0 0.0
  %358 = vmatpush1.msra.mxu0 0.0
  %359 = vmatprep.subr.mxu0 0.0
  %360 = vmatpush1.msra.mxu0 0.0
  %361 = vmatprep.subr.mxu0 0.0
  %362 = vmatpush1.msra.mxu0 0.0
  %363 = vmatprep.subr.mxu0 0.0
  %364 = vmatpush1.msra.mxu0 0.0
  %365 = vmatprep.subr.mxu0 0.0
  %366 = vmatpush1.msra.mxu0 0.0
  %367 = vmatprep.subr.mxu0 0.0
  %368 = vmatpush1.msra.mxu0 0.0
  %369 = vmatprep.subr.mxu0 0.0
  %370 = vmatpush1.msra.mxu0 0.0
  %371 = vmatprep.subr.mxu0 0.0
  %372 = vmatpush1.msra.mxu0 0.0
  %373 = vmatprep.subr.mxu0 0.0
  %374 = vmatpush1.msra.mxu0 0.0
  %375 = vmatprep.subr.mxu0 0.0
  %376 = vmatpush1.msra.mxu0 0.0
  %377 = vmatprep.subr.mxu0 0.0
  %378 = vmatpush1.msra.mxu0 0.0
  %379 = vmatprep.subr.mxu0 0.0
  %380 = vmatpush1.msra.mxu0 0.0
  %381 = vmatprep.subr.mxu0 0.0
  %382 = vmatpush1.msra.mxu0 0.0
  %383 = vmatprep.subr.mxu0 0.0
  %384 = vmatpush1.msra.mxu0 0.0
  %385 = vmatprep.subr.mxu0 0.0
  %386 = vmatpush1.msra.mxu0 0.0
  %387 = vmatprep.subr.mxu0 0.0
  %388 = vmatpush1.msra.mxu0 0.0
  %389 = vmatprep.subr.mxu0 0.0
  %390 = vmatpush1.msra.mxu0 0.0
  %391 = vmatprep.subr.mxu0 0.0
  %392 = vmatpush1.msra.mxu0 0.0
  %393 = vmatprep.subr.mxu0 0.0
  %394 = vmatpush1.msra.mxu0 0.0
  %395 = vmatprep.subr.mxu0 0.0
  %396 = vmatpush1.msra.mxu0 0.0
  %397 = vmatprep.subr.mxu0 0.0
  %398 = vmatpush1.msra.mxu0 0.0
  %399 = vmatprep.subr.mxu0 0.0
  %400 = vmatpush1.msra.mxu0 0.0
  %401 = vmatprep.subr.mxu0 0.0
  %402 = vmatpush1.msra.mxu0 0.0
  %403 = vmatprep.subr.mxu0 0.0
  %404 = vmatpush1.msra.mxu0 0.0
  %405 = vmatprep.subr.mxu0 0.0
  %406 = vmatpush1.msra.mxu0 0.0
  %407 = vmatprep.subr.mxu0 0.0
  %408 = vmatpush1.msra.mxu0 0.0
  %409 = vmatprep.subr.mxu0 0.0
  %410 = vmatpush1.msra.mxu0 0.0
  %411 = vmatprep.subr.mxu0 0.0
  %412 = vmatpush1.msra.mxu0 0.0
  %413 = vmatprep.mubr.f32.mxu0 0.0
  %414 = vmatmul.mubr.f32.gmra.mrb[0].mxu0 %v347
  %v415 = vpop.f32.mrb[0].mxu0
  %v416 = vadd.f32 0.0, %v415
  %v417 = vpop.f32.mrb[0].mxu0
  %418 = vdwg.mxu0
  %v420 = vrot.slane %v416, 6
  %v421 = vrot.slane %v416, 7
  %v424 = vadd.f32 %v11, %v420
  %v425 = vadd.f32 %v12, %v421
  %v426 = vxor.u32 %v424, 2147483648
  %v427 = vxor.u32 %v425, 2147483648
  %v428 = vmul.f32 %v426, 1.442695
  %v429 = vpow.pop %v428
  %v430 = vmul.f32 %v427, 1.442695
  %v431 = vpow.pop %v430
  %v432 = vadd.f32 %v429, 1.0
  %v433 = vadd.f32 %v431, 1.0
  %v434 = vrcp.pop %v432
  %v435 = vmul.f32 1.0, %v434
  %v436 = vrcp.pop %v433
  %v437 = vmul.f32 1.0, %v436
  %v438 = vtanh.pop %v424
  %v439 = vtanh.pop %v425
  %v442 = vrot.slane %v301, 7
  %v443 = vrot.slane %v302, 7
  %v446 = vmul.f32 %v435, %v442
  %v447 = vmul.f32 %v437, %v443
  %450 = vrot.lane.b32.xlu0 %v438, 64
  %v451 = vpop.permute.xlu0 %450
  %452 = vrot.lane.b32.xlu0 %v439, 64
  %v453 = vpop.permute.xlu0 %452
  %v456 = vmul.f32 %v435, %v451
  %v457 = vmul.f32 %v437, %v453
  %460 = vrot.lane.b32.xlu0 %v456, 32
  %v461 = vpop.permute.xlu0 %460
  %462 = vrot.lane.b32.xlu0 %v457, 32
  %v463 = vpop.permute.xlu0 %462
  %v466 = vadd.f32 %v446, %v461
  %v467 = vadd.f32 %v447, %v463
  %v468 = vtanh.pop %v466
  %v469 = vtanh.pop %v467
  %472 = vrot.lane.b32.xlu0 %v468, 64
  %v473 = vpop.permute.xlu0 %472
  %474 = vrot.lane.b32.xlu0 %v469, 64
  %v475 = vpop.permute.xlu0 %474
  %v478 = vmul.f32 %v435, %v473
  %v479 = vmul.f32 %v437, %v475
  %v483 = vunpack.c.l.s4 1983009808
  %v484 = vunpack.c.0.s8 %v483
  %v485 = vlaneseq
  %v486 = vshrl.u32 %v485, 7
  %v487 = vsub.s32 %v484, %v486
  %v488 = vrot.slane %v478, %v487
  %v489 = vcombine.high %v488, %v488
  %v491 = vunpack.c.l.s4 1983009808
  %v492 = vunpack.c.0.s8 %v491
  %v493 = vlaneseq
  %v494 = vshrl.u32 %v493, 7
  %v495 = vsub.s32 %v492, %v494
  %v496 = vrot.slane %v479, %v495
  %v497 = vcombine.high %v496, %v496
  %v498 = vsel %vm161, %v489, %v489
  %v499 = vsel %vm163, %v489, %v498
  %v500 = vrot.slane %v497, 7
  %v501 = vsel %vm166, %v500, %v499
  %v502 = vsel %vm168, %v500, %v501
  %v503 = vsel %vm170, %v500, %v502
  %v504 = vsel %vm172, %v500, %v503
  %505 = vrot.lane.b32.xlu0 %v504, 96
  %v506 = vpop.permute.xlu0 %505
  %vm508 = vcmask 779776
  %509 = vst.msk [vmem:[%s2] sm:$0x3] %vm508, %v506
  %v510 = vrot.slane %v478, 2
  %v511 = vrot.slane %v479, 1
  %v512 = vsel %vm166, %v511, %v510
  %513 = vrot.lane.b32.xlu0 %v512, 32
  %v514 = vpop.permute.xlu0 %513
  %v515 = vsel %vm17, %v514, 0
  %517 = vmatprep.subr.mxu0 0.0
  %518 = vmatpush1.msra.mxu0 %v13
  %519 = vmatprep.subr.mxu0 0.0
  %520 = vmatpush1.msra.mxu0 %v14
  %521 = vmatprep.subr.mxu0 0.0
  %522 = vmatpush1.msra.mxu0 %v15
  %523 = vmatprep.subr.mxu0 0.0
  %524 = vmatpush1.msra.mxu0 %v16
  %525 = vmatprep.subr.mxu0 0.0
  %526 = vmatpush1.msra.mxu0 0.0
  %527 = vmatprep.subr.mxu0 0.0
  %528 = vmatpush1.msra.mxu0 0.0
  %529 = vmatprep.subr.mxu0 0.0
  %530 = vmatpush1.msra.mxu0 0.0
  %531 = vmatprep.subr.mxu0 0.0
  %532 = vmatpush1.msra.mxu0 0.0
  %533 = vmatprep.subr.mxu0 0.0
  %534 = vmatpush1.msra.mxu0 0.0
  %535 = vmatprep.subr.mxu0 0.0
  %536 = vmatpush1.msra.mxu0 0.0
  %537 = vmatprep.subr.mxu0 0.0
  %538 = vmatpush1.msra.mxu0 0.0
  %539 = vmatprep.subr.mxu0 0.0
  %540 = vmatpush1.msra.mxu0 0.0
  %541 = vmatprep.subr.mxu0 0.0
  %542 = vmatpush1.msra.mxu0 0.0
  %543 = vmatprep.subr.mxu0 0.0
  %544 = vmatpush1.msra.mxu0 0.0
  %545 = vmatprep.subr.mxu0 0.0
  %546 = vmatpush1.msra.mxu0 0.0
  %547 = vmatprep.subr.mxu0 0.0
  %548 = vmatpush1.msra.mxu0 0.0
  %549 = vmatprep.subr.mxu0 0.0
  %550 = vmatpush1.msra.mxu0 0.0
  %551 = vmatprep.subr.mxu0 0.0
  %552 = vmatpush1.msra.mxu0 0.0
  %553 = vmatprep.subr.mxu0 0.0
  %554 = vmatpush1.msra.mxu0 0.0
  %555 = vmatprep.subr.mxu0 0.0
  %556 = vmatpush1.msra.mxu0 0.0
  %557 = vmatprep.subr.mxu0 0.0
  %558 = vmatpush1.msra.mxu0 0.0
  %559 = vmatprep.subr.mxu0 0.0
  %560 = vmatpush1.msra.mxu0 0.0
  %561 = vmatprep.subr.mxu0 0.0
  %562 = vmatpush1.msra.mxu0 0.0
  %563 = vmatprep.subr.mxu0 0.0
  %564 = vmatpush1.msra.mxu0 0.0
  %565 = vmatprep.subr.mxu0 0.0
  %566 = vmatpush1.msra.mxu0 0.0
  %567 = vmatprep.subr.mxu0 0.0
  %568 = vmatpush1.msra.mxu0 0.0
  %569 = vmatprep.subr.mxu0 0.0
  %570 = vmatpush1.msra.mxu0 0.0
  %571 = vmatprep.subr.mxu0 0.0
  %572 = vmatpush1.msra.mxu0 0.0
  %573 = vmatprep.subr.mxu0 0.0
  %574 = vmatpush1.msra.mxu0 0.0
  %575 = vmatprep.subr.mxu0 0.0
  %576 = vmatpush1.msra.mxu0 0.0
  %577 = vmatprep.subr.mxu0 0.0
  %578 = vmatpush1.msra.mxu0 0.0
  %579 = vmatprep.subr.mxu0 0.0
  %580 = vmatpush1.msra.mxu0 0.0
  %581 = vmatprep.mubr.f32.mxu0 0.0
  %582 = vmatmul.mubr.f32.gmra.mrb[0].mxu0 %v515
  %v583 = vpop.f32.mrb[0].mxu0
  %v584 = vadd.f32 0.0, %v583
  %v585 = vpop.f32.mrb[0].mxu0
  %586 = vdwg.mxu0
  %v588 = vrot.slane %v584, 5
  %v589 = vrot.slane %v584, 6
  %v592 = vadd.f32 %v11, %v588
  %v593 = vadd.f32 %v12, %v589
  %v594 = vxor.u32 %v592, 2147483648
  %v595 = vxor.u32 %v593, 2147483648
  %v596 = vmul.f32 %v594, 1.442695
  %v597 = vpow.pop %v596
  %v598 = vmul.f32 %v595, 1.442695
  %v599 = vpow.pop %v598
  %v600 = vadd.f32 %v597, 1.0
  %v601 = vadd.f32 %v599, 1.0
  %v602 = vrcp.pop %v600
  %v603 = vmul.f32 1.0, %v602
  %v604 = vrcp.pop %v601
  %v605 = vmul.f32 1.0, %v604
  %v606 = vtanh.pop %v592
  %v607 = vtanh.pop %v593
  %v610 = vrot.slane %v466, 7
  %v611 = vrot.slane %v467, 7
  %v614 = vmul.f32 %v603, %v610
  %v615 = vmul.f32 %v605, %v611
  %618 = vrot.lane.b32.xlu0 %v606, 64
  %v619 = vpop.permute.xlu0 %618
  %620 = vrot.lane.b32.xlu0 %v607, 64
  %v621 = vpop.permute.xlu0 %620
  %v624 = vmul.f32 %v603, %v619
  %v625 = vmul.f32 %v605, %v621
  %628 = vrot.lane.b32.xlu0 %v624, 32
  %v629 = vpop.permute.xlu0 %628
  %630 = vrot.lane.b32.xlu0 %v625, 32
  %v631 = vpop.permute.xlu0 %630
  %v634 = vadd.f32 %v614, %v629
  %v635 = vadd.f32 %v615, %v631
  %v636 = vtanh.pop %v634
  %v637 = vtanh.pop %v635
  %640 = vrot.lane.b32.xlu0 %v636, 64
  %v641 = vpop.permute.xlu0 %640
  %642 = vrot.lane.b32.xlu0 %v637, 64
  %v643 = vpop.permute.xlu0 %642
  %v646 = vmul.f32 %v603, %v641
  %v647 = vmul.f32 %v605, %v643
  %v651 = vunpack.c.l.s4 1983009808
  %v652 = vunpack.c.0.s8 %v651
  %v653 = vlaneseq
  %v654 = vshrl.u32 %v653, 7
  %v655 = vsub.s32 %v652, %v654
  %v656 = vrot.slane %v646, %v655
  %v657 = vcombine.high %v656, %v656
  %v659 = vunpack.c.l.s4 1983009808
  %v660 = vunpack.c.0.s8 %v659
  %v661 = vlaneseq
  %v662 = vshrl.u32 %v661, 7
  %v663 = vsub.s32 %v660, %v662
  %v664 = vrot.slane %v647, %v663
  %v665 = vcombine.high %v664, %v664
  %v666 = vrot.slane %v657, 1
  %v667 = vsel %vm161, %v666, %v666
  %v668 = vsel %vm163, %v666, %v667
  %v669 = vsel %vm166, %v665, %v668
  %v670 = vsel %vm168, %v665, %v669
  %v671 = vsel %vm170, %v665, %v670
  %v672 = vsel %vm172, %v665, %v671
  %vm674 = vcmask 1042176
  %675 = vst.msk [vmem:[%s2] sm:$0x3] %vm674, %v672
  %v676 = vrot.slane %v646, 3
  %v677 = vrot.slane %v647, 2
  %v678 = vsel %vm166, %v677, %v676
  %679 = vrot.lane.b32.xlu0 %v678, 32
  %v680 = vpop.permute.xlu0 %679
  %v681 = vsel %vm17, %v680, 0
  %683 = vmatprep.subr.mxu0 0.0
  %684 = vmatpush1.msra.mxu0 %v13
  %685 = vmatprep.subr.mxu0 0.0
  %686 = vmatpush1.msra.mxu0 %v14
  %687 = vmatprep.subr.mxu0 0.0
  %688 = vmatpush1.msra.mxu0 %v15
  %689 = vmatprep.subr.mxu0 0.0
  %690 = vmatpush1.msra.mxu0 %v16
  %691 = vmatprep.subr.mxu0 0.0
  %692 = vmatpush1.msra.mxu0 0.0
  %693 = vmatprep.subr.mxu0 0.0
  %694 = vmatpush1.msra.mxu0 0.0
  %695 = vmatprep.subr.mxu0 0.0
  %696 = vmatpush1.msra.mxu0 0.0
  %697 = vmatprep.subr.mxu0 0.0
  %698 = vmatpush1.msra.mxu0 0.0
  %699 = vmatprep.subr.mxu0 0.0
  %700 = vmatpush1.msra.mxu0 0.0
  %701 = vmatprep.subr.mxu0 0.0
  %702 = vmatpush1.msra.mxu0 0.0
  %703 = vmatprep.subr.mxu0 0.0
  %704 = vmatpush1.msra.mxu0 0.0
  %705 = vmatprep.subr.mxu0 0.0
  %706 = vmatpush1.msra.mxu0 0.0
  %707 = vmatprep.subr.mxu0 0.0
  %708 = vmatpush1.msra.mxu0 0.0
  %709 = vmatprep.subr.mxu0 0.0
  %710 = vmatpush1.msra.mxu0 0.0
  %711 = vmatprep.subr.mxu0 0.0
  %712 = vmatpush1.msra.mxu0 0.0
  %713 = vmatprep.subr.mxu0 0.0
  %714 = vmatpush1.msra.mxu0 0.0
  %715 = vmatprep.subr.mxu0 0.0
  %716 = vmatpush1.msra.mxu0 0.0
  %717 = vmatprep.subr.mxu0 0.0
  %718 = vmatpush1.msra.mxu0 0.0
  %719 = vmatprep.subr.mxu0 0.0
  %720 = vmatpush1.msra.mxu0 0.0
  %721 = vmatprep.subr.mxu0 0.0
  %722 = vmatpush1.msra.mxu0 0.0
  %723 = vmatprep.subr.mxu0 0.0
  %724 = vmatpush1.msra.mxu0 0.0
  %725 = vmatprep.subr.mxu0 0.0
  %726 = vmatpush1.msra.mxu0 0.0
  %727 = vmatprep.subr.mxu0 0.0
  %728 = vmatpush1.msra.mxu0 0.0
  %729 = vmatprep.subr.mxu0 0.0
  %730 = vmatpush1.msra.mxu0 0.0
  %731 = vmatprep.subr.mxu0 0.0
  %732 = vmatpush1.msra.mxu0 0.0
  %733 = vmatprep.subr.mxu0 0.0
  %734 = vmatpush1.msra.mxu0 0.0
  %735 = vmatprep.subr.mxu0 0.0
  %736 = vmatpush1.msra.mxu0 0.0
  %737 = vmatprep.subr.mxu0 0.0
  %738 = vmatpush1.msra.mxu0 0.0
  %739 = vmatprep.subr.mxu0 0.0
  %740 = vmatpush1.msra.mxu0 0.0
  %741 = vmatprep.subr.mxu0 0.0
  %742 = vmatpush1.msra.mxu0 0.0
  %743 = vmatprep.subr.mxu0 0.0
  %744 = vmatpush1.msra.mxu0 0.0
  %745 = vmatprep.subr.mxu0 0.0
  %746 = vmatpush1.msra.mxu0 0.0
  %747 = vmatprep.mubr.f32.mxu0 0.0
  %748 = vmatmul.mubr.f32.gmra.mrb[0].mxu0 %v681
  %v749 = vpop.f32.mrb[0].mxu0
  %v750 = vadd.f32 0.0, %v749
  %v751 = vpop.f32.mrb[0].mxu0
  %752 = vdwg.mxu0
  %v754 = vrot.slane %v750, 4
  %v755 = vrot.slane %v750, 5
  %v758 = vadd.f32 %v11, %v754
  %v759 = vadd.f32 %v12, %v755
  %v760 = vxor.u32 %v758, 2147483648
  %v761 = vxor.u32 %v759, 2147483648
  %v762 = vmul.f32 %v760, 1.442695
  %v763 = vpow.pop %v762
  %v764 = vmul.f32 %v761, 1.442695
  %v765 = vpow.pop %v764
  %v766 = vadd.f32 %v763, 1.0
  %v767 = vadd.f32 %v765, 1.0
  %v768 = vrcp.pop %v766
  %v769 = vmul.f32 1.0, %v768
  %v770 = vrcp.pop %v767
  %v771 = vmul.f32 1.0, %v770
  %v772 = vtanh.pop %v758
  %v773 = vtanh.pop %v759
  %v776 = vrot.slane %v634, 7
  %v777 = vrot.slane %v635, 7
  %v780 = vmul.f32 %v769, %v776
  %v781 = vmul.f32 %v771, %v777
  %784 = vrot.lane.b32.xlu0 %v772, 64
  %v785 = vpop.permute.xlu0 %784
  %786 = vrot.lane.b32.xlu0 %v773, 64
  %v787 = vpop.permute.xlu0 %786
  %v790 = vmul.f32 %v769, %v785
  %v791 = vmul.f32 %v771, %v787
  %794 = vrot.lane.b32.xlu0 %v790, 32
  %v795 = vpop.permute.xlu0 %794
  %796 = vrot.lane.b32.xlu0 %v791, 32
  %v797 = vpop.permute.xlu0 %796
  %v800 = vadd.f32 %v780, %v795
  %v801 = vadd.f32 %v781, %v797
  %v802 = vtanh.pop %v800
  %v803 = vtanh.pop %v801
  %806 = vrot.lane.b32.xlu0 %v802, 64
  %v807 = vpop.permute.xlu0 %806
  %808 = vrot.lane.b32.xlu0 %v803, 64
  %v809 = vpop.permute.xlu0 %808
  %v812 = vmul.f32 %v769, %v807
  %v813 = vmul.f32 %v771, %v809
  %v816 = vcombine.high %v812, %v812
  %v818 = vunpack.c.l.s4 1983009808
  %v819 = vunpack.c.0.s8 %v818
  %v820 = vlaneseq
  %v821 = vshrl.u32 %v820, 7
  %v822 = vsub.s32 %v819, %v821
  %v823 = vrot.slane %v816, %v822
  %v824 = vcombine.high %v813, %v813
  %v826 = vunpack.c.l.s4 1983009808
  %v827 = vunpack.c.0.s8 %v826
  %v828 = vlaneseq
  %v829 = vshrl.u32 %v828, 7
  %v830 = vsub.s32 %v827, %v829
  %v831 = vrot.slane %v824, %v830
  %v832 = vsel %vm161, %v823, %v823
  %v833 = vsel %vm163, %v823, %v832
  %v834 = vrot.slane %v831, 7
  %v835 = vsel %vm166, %v834, %v833
  %v836 = vsel %vm168, %v834, %v835
  %v837 = vsel %vm170, %v834, %v836
  %v838 = vsel %vm172, %v834, %v837
  %839 = vrot.lane.b32.xlu0 %v838, 32
  %v840 = vpop.permute.xlu0 %839
  %842 = vst.msk [vmem:[%s2 + $0x2] sm:$0x3] %vm177, %v840
  %v843 = vrot.slane %v812, 4
  %v844 = vrot.slane %v813, 3
  %v845 = vsel %vm166, %v844, %v843
  %846 = vrot.lane.b32.xlu0 %v845, 32
  %v847 = vpop.permute.xlu0 %846
  %v848 = vsel %vm17, %v847, 0
  %850 = vmatprep.subr.mxu0 0.0
  %851 = vmatpush1.msra.mxu0 %v13
  %852 = vmatprep.subr.mxu0 0.0
  %853 = vmatpush1.msra.mxu0 %v14
  %854 = vmatprep.subr.mxu0 0.0
  %855 = vmatpush1.msra.mxu0 %v15
  %856 = vmatprep.subr.mxu0 0.0
  %857 = vmatpush1.msra.mxu0 %v16
  %858 = vmatprep.subr.mxu0 0.0
  %859 = vmatpush1.msra.mxu0 0.0
  %860 = vmatprep.subr.mxu0 0.0
  %861 = vmatpush1.msra.mxu0 0.0
  %862 = vmatprep.subr.mxu0 0.0
  %863 = vmatpush1.msra.mxu0 0.0
  %864 = vmatprep.subr.mxu0 0.0
  %865 = vmatpush1.msra.mxu0 0.0
  %866 = vmatprep.subr.mxu0 0.0
  %867 = vmatpush1.msra.mxu0 0.0
  %868 = vmatprep.subr.mxu0 0.0
  %869 = vmatpush1.msra.mxu0 0.0
  %870 = vmatprep.subr.mxu0 0.0
  %871 = vmatpush1.msra.mxu0 0.0
  %872 = vmatprep.subr.mxu0 0.0
  %873 = vmatpush1.msra.mxu0 0.0
  %874 = vmatprep.subr.mxu0 0.0
  %875 = vmatpush1.msra.mxu0 0.0
  %876 = vmatprep.subr.mxu0 0.0
  %877 = vmatpush1.msra.mxu0 0.0
  %878 = vmatprep.subr.mxu0 0.0
  %879 = vmatpush1.msra.mxu0 0.0
  %880 = vmatprep.subr.mxu0 0.0
  %881 = vmatpush1.msra.mxu0 0.0
  %882 = vmatprep.subr.mxu0 0.0
  %883 = vmatpush1.msra.mxu0 0.0
  %884 = vmatprep.subr.mxu0 0.0
  %885 = vmatpush1.msra.mxu0 0.0
  %886 = vmatprep.subr.mxu0 0.0
  %887 = vmatpush1.msra.mxu0 0.0
  %888 = vmatprep.subr.mxu0 0.0
  %889 = vmatpush1.msra.mxu0 0.0
  %890 = vmatprep.subr.mxu0 0.0
  %891 = vmatpush1.msra.mxu0 0.0
  %892 = vmatprep.subr.mxu0 0.0
  %893 = vmatpush1.msra.mxu0 0.0
  %894 = vmatprep.subr.mxu0 0.0
  %895 = vmatpush1.msra.mxu0 0.0
  %896 = vmatprep.subr.mxu0 0.0
  %897 = vmatpush1.msra.mxu0 0.0
  %898 = vmatprep.subr.mxu0 0.0
  %899 = vmatpush1.msra.mxu0 0.0
  %900 = vmatprep.subr.mxu0 0.0
  %901 = vmatpush1.msra.mxu0 0.0
  %902 = vmatprep.subr.mxu0 0.0
  %903 = vmatpush1.msra.mxu0 0.0
  %904 = vmatprep.subr.mxu0 0.0
  %905 = vmatpush1.msra.mxu0 0.0
  %906 = vmatprep.subr.mxu0 0.0
  %907 = vmatpush1.msra.mxu0 0.0
  %908 = vmatprep.subr.mxu0 0.0
  %909 = vmatpush1.msra.mxu0 0.0
  %910 = vmatprep.subr.mxu0 0.0
  %911 = vmatpush1.msra.mxu0 0.0
  %912 = vmatprep.subr.mxu0 0.0
  %913 = vmatpush1.msra.mxu0 0.0
  %914 = vmatprep.mubr.f32.mxu0 0.0
  %915 = vmatmul.mubr.f32.gmra.mrb[0].mxu0 %v848
  %v916 = vpop.f32.mrb[0].mxu0
  %v917 = vadd.f32 0.0, %v916
  %v918 = vpop.f32.mrb[0].mxu0
  %919 = vdwg.mxu0
  %v921 = vrot.slane %v917, 3
  %v922 = vrot.slane %v917, 4
  %v925 = vadd.f32 %v11, %v921
  %v926 = vadd.f32 %v12, %v922
  %v927 = vxor.u32 %v925, 2147483648
  %v928 = vxor.u32 %v926, 2147483648
  %v929 = vmul.f32 %v927, 1.442695
  %v930 = vpow.pop %v929
  %v931 = vmul.f32 %v928, 1.442695
  %v932 = vpow.pop %v931
  %v933 = vadd.f32 %v930, 1.0
  %v934 = vadd.f32 %v932, 1.0
  %v935 = vrcp.pop %v933
  %v936 = vmul.f32 1.0, %v935
  %v937 = vrcp.pop %v934
  %v938 = vmul.f32 1.0, %v937
  %v939 = vtanh.pop %v925
  %v940 = vtanh.pop %v926
  %v943 = vrot.slane %v800, 7
  %v944 = vrot.slane %v801, 7
  %v947 = vmul.f32 %v936, %v943
  %v948 = vmul.f32 %v938, %v944
  %951 = vrot.lane.b32.xlu0 %v939, 64
  %v952 = vpop.permute.xlu0 %951
  %953 = vrot.lane.b32.xlu0 %v940, 64
  %v954 = vpop.permute.xlu0 %953
  %v957 = vmul.f32 %v936, %v952
  %v958 = vmul.f32 %v938, %v954
  %961 = vrot.lane.b32.xlu0 %v957, 32
  %v962 = vpop.permute.xlu0 %961
  %963 = vrot.lane.b32.xlu0 %v958, 32
  %v964 = vpop.permute.xlu0 %963
  %v967 = vadd.f32 %v947, %v962
  %v968 = vadd.f32 %v948, %v964
  %v969 = vtanh.pop %v967
  %v970 = vtanh.pop %v968
  %973 = vrot.lane.b32.xlu0 %v969, 64
  %v974 = vpop.permute.xlu0 %973
  %975 = vrot.lane.b32.xlu0 %v970, 64
  %v976 = vpop.permute.xlu0 %975
  %v979 = vmul.f32 %v936, %v974
  %v980 = vmul.f32 %v938, %v976
  %v983 = vcombine.high %v979, %v979
  %v985 = vunpack.c.l.s4 1983009808
  %v986 = vunpack.c.0.s8 %v985
  %v987 = vlaneseq
  %v988 = vshrl.u32 %v987, 7
  %v989 = vsub.s32 %v986, %v988
  %v990 = vrot.slane %v983, %v989
  %v991 = vcombine.high %v980, %v980
  %v993 = vunpack.c.l.s4 1983009808
  %v994 = vunpack.c.0.s8 %v993
  %v995 = vlaneseq
  %v996 = vshrl.u32 %v995, 7
  %v997 = vsub.s32 %v994, %v996
  %v998 = vrot.slane %v991, %v997
  %v999 = vrot.slane %v990, 1
  %v1000 = vsel %vm161, %v999, %v999
  %v1001 = vsel %vm163, %v999, %v1000
  %v1002 = vsel %vm166, %v998, %v1001
  %v1003 = vsel %vm168, %v998, %v1002
  %v1004 = vsel %vm170, %v998, %v1003
  %v1005 = vsel %vm172, %v998, %v1004
  %1006 = vrot.lane.b32.xlu0 %v1005, 64
  %v1007 = vpop.permute.xlu0 %1006
  %1009 = vst.msk [vmem:[%s2 + $0x2] sm:$0x3] %vm341, %v1007
  %v1010 = vrot.slane %v979, 5
  %v1011 = vrot.slane %v980, 4
  %v1012 = vsel %vm166, %v1011, %v1010
  %1013 = vrot.lane.b32.xlu0 %v1012, 32
  %v1014 = vpop.permute.xlu0 %1013
  %v1015 = vsel %vm17, %v1014, 0
  %1017 = vmatprep.subr.mxu0 0.0
  %1018 = vmatpush1.msra.mxu0 %v13
  %1019 = vmatprep.subr.mxu0 0.0
  %1020 = vmatpush1.msra.mxu0 %v14
  %1021 = vmatprep.subr.mxu0 0.0
  %1022 = vmatpush1.msra.mxu0 %v15
  %1023 = vmatprep.subr.mxu0 0.0
  %1024 = vmatpush1.msra.mxu0 %v16
  %1025 = vmatprep.subr.mxu0 0.0
  %1026 = vmatpush1.msra.mxu0 0.0
  %1027 = vmatprep.subr.mxu0 0.0
  %1028 = vmatpush1.msra.mxu0 0.0
  %1029 = vmatprep.subr.mxu0 0.0
  %1030 = vmatpush1.msra.mxu0 0.0
  %1031 = vmatprep.subr.mxu0 0.0
  %1032 = vmatpush1.msra.mxu0 0.0
  %1033 = vmatprep.subr.mxu0 0.0
  %1034 = vmatpush1.msra.mxu0 0.0
  %1035 = vmatprep.subr.mxu0 0.0
  %1036 = vmatpush1.msra.mxu0 0.0
  %1037 = vmatprep.subr.mxu0 0.0
  %1038 = vmatpush1.msra.mxu0 0.0
  %1039 = vmatprep.subr.mxu0 0.0
  %1040 = vmatpush1.msra.mxu0 0.0
  %1041 = vmatprep.subr.mxu0 0.0
  %1042 = vmatpush1.msra.mxu0 0.0
  %1043 = vmatprep.subr.mxu0 0.0
  %1044 = vmatpush1.msra.mxu0 0.0
  %1045 = vmatprep.subr.mxu0 0.0
  %1046 = vmatpush1.msra.mxu0 0.0
  %1047 = vmatprep.subr.mxu0 0.0
  %1048 = vmatpush1.msra.mxu0 0.0
  %1049 = vmatprep.subr.mxu0 0.0
  %1050 = vmatpush1.msra.mxu0 0.0
  %1051 = vmatprep.subr.mxu0 0.0
  %1052 = vmatpush1.msra.mxu0 0.0
  %1053 = vmatprep.subr.mxu0 0.0
  %1054 = vmatpush1.msra.mxu0 0.0
  %1055 = vmatprep.subr.mxu0 0.0
  %1056 = vmatpush1.msra.mxu0 0.0
  %1057 = vmatprep.subr.mxu0 0.0
  %1058 = vmatpush1.msra.mxu0 0.0
  %1059 = vmatprep.subr.mxu0 0.0
  %1060 = vmatpush1.msra.mxu0 0.0
  %1061 = vmatprep.subr.mxu0 0.0
  %1062 = vmatpush1.msra.mxu0 0.0
  %1063 = vmatprep.subr.mxu0 0.0
  %1064 = vmatpush1.msra.mxu0 0.0
  %1065 = vmatprep.subr.mxu0 0.0
  %1066 = vmatpush1.msra.mxu0 0.0
  %1067 = vmatprep.subr.mxu0 0.0
  %1068 = vmatpush1.msra.mxu0 0.0
  %1069 = vmatprep.subr.mxu0 0.0
  %1070 = vmatpush1.msra.mxu0 0.0
  %1071 = vmatprep.subr.mxu0 0.0
  %1072 = vmatpush1.msra.mxu0 0.0
  %1073 = vmatprep.subr.mxu0 0.0
  %1074 = vmatpush1.msra.mxu0 0.0
  %1075 = vmatprep.subr.mxu0 0.0
  %1076 = vmatpush1.msra.mxu0 0.0
  %1077 = vmatprep.subr.mxu0 0.0
  %1078 = vmatpush1.msra.mxu0 0.0
  %1079 = vmatprep.subr.mxu0 0.0
  %1080 = vmatpush1.msra.mxu0 0.0
  %1081 = vmatprep.mubr.f32.mxu0 0.0
  %1082 = vmatmul.mubr.f32.gmra.mrb[0].mxu0 %v1015
  %v1083 = vpop.f32.mrb[0].mxu0
  %v1084 = vadd.f32 0.0, %v1083
  %v1085 = vpop.f32.mrb[0].mxu0
  %1086 = vdwg.mxu0
  %v1088 = vrot.slane %v1084, 2
  %v1089 = vrot.slane %v1084, 3
  %v1092 = vadd.f32 %v11, %v1088
  %v1093 = vadd.f32 %v12, %v1089
  %v1094 = vxor.u32 %v1092, 2147483648
  %v1095 = vxor.u32 %v1093, 2147483648
  %v1096 = vmul.f32 %v1094, 1.442695
  %v1097 = vpow.pop %v1096
  %v1098 = vmul.f32 %v1095, 1.442695
  %v1099 = vpow.pop %v1098
  %v1100 = vadd.f32 %v1097, 1.0
  %v1101 = vadd.f32 %v1099, 1.0
  %v1102 = vrcp.pop %v1100
  %v1103 = vmul.f32 1.0, %v1102
  %v1104 = vrcp.pop %v1101
  %v1105 = vmul.f32 1.0, %v1104
  %v1106 = vtanh.pop %v1092
  %v1107 = vtanh.pop %v1093
  %v1110 = vrot.slane %v967, 7
  %v1111 = vrot.slane %v968, 7
  %v1114 = vmul.f32 %v1103, %v1110
  %v1115 = vmul.f32 %v1105, %v1111
  %1118 = vrot.lane.b32.xlu0 %v1106, 64
  %v1119 = vpop.permute.xlu0 %1118
  %1120 = vrot.lane.b32.xlu0 %v1107, 64
  %v1121 = vpop.permute.xlu0 %1120
  %v1124 = vmul.f32 %v1103, %v1119
  %v1125 = vmul.f32 %v1105, %v1121
  %1128 = vrot.lane.b32.xlu0 %v1124, 32
  %v1129 = vpop.permute.xlu0 %1128
  %1130 = vrot.lane.b32.xlu0 %v1125, 32
  %v1131 = vpop.permute.xlu0 %1130
  %v1134 = vadd.f32 %v1114, %v1129
  %v1135 = vadd.f32 %v1115, %v1131
  %v1136 = vtanh.pop %v1134
  %v1137 = vtanh.pop %v1135
  %1140 = vrot.lane.b32.xlu0 %v1136, 64
  %v1141 = vpop.permute.xlu0 %1140
  %1142 = vrot.lane.b32.xlu0 %v1137, 64
  %v1143 = vpop.permute.xlu0 %1142
  %v1146 = vmul.f32 %v1103, %v1141
  %v1147 = vmul.f32 %v1105, %v1143
  %v1150 = vcombine.high %v1146, %v1146
  %v1152 = vunpack.c.l.s4 1983009808
  %v1153 = vunpack.c.0.s8 %v1152
  %v1154 = vlaneseq
  %v1155 = vshrl.u32 %v1154, 7
  %v1156 = vsub.s32 %v1153, %v1155
  %v1157 = vrot.slane %v1150, %v1156
  %v1158 = vcombine.high %v1157, %v1157
  %v1159 = vcombine.high %v1147, %v1147
  %v1161 = vunpack.c.l.s4 1983009808
  %v1162 = vunpack.c.0.s8 %v1161
  %v1163 = vlaneseq
  %v1164 = vshrl.u32 %v1163, 7
  %v1165 = vsub.s32 %v1162, %v1164
  %v1166 = vrot.slane %v1159, %v1165
  %v1167 = vcombine.high %v1166, %v1166
  %v1168 = vsel %vm161, %v1158, %v1158
  %v1169 = vsel %vm163, %v1158, %v1168
  %v1170 = vrot.slane %v1167, 7
  %v1171 = vsel %vm166, %v1170, %v1169
  %v1172 = vsel %vm168, %v1170, %v1171
  %v1173 = vsel %vm170, %v1170, %v1172
  %v1174 = vsel %vm172, %v1170, %v1173
  %1175 = vrot.lane.b32.xlu0 %v1174, 96
  %v1176 = vpop.permute.xlu0 %1175
  %1178 = vst.msk [vmem:[%s2 + $0x2] sm:$0x3] %vm508, %v1176
  %v1179 = vrot.slane %v1146, 6
  %v1180 = vrot.slane %v1147, 5
  %v1181 = vsel %vm166, %v1180, %v1179
  %1182 = vrot.lane.b32.xlu0 %v1181, 32
  %v1183 = vpop.permute.xlu0 %1182
  %v1184 = vsel %vm17, %v1183, 0
  %1186 = vmatprep.subr.mxu0 0.0
  %1187 = vmatpush1.msra.mxu0 %v13
  %1188 = vmatprep.subr.mxu0 0.0
  %1189 = vmatpush1.msra.mxu0 %v14
  %1190 = vmatprep.subr.mxu0 0.0
  %1191 = vmatpush1.msra.mxu0 %v15
  %1192 = vmatprep.subr.mxu0 0.0
  %1193 = vmatpush1.msra.mxu0 %v16
  %1194 = vmatprep.subr.mxu0 0.0
  %1195 = vmatpush1.msra.mxu0 0.0
  %1196 = vmatprep.subr.mxu0 0.0
  %1197 = vmatpush1.msra.mxu0 0.0
  %1198 = vmatprep.subr.mxu0 0.0
  %1199 = vmatpush1.msra.mxu0 0.0
  %1200 = vmatprep.subr.mxu0 0.0
  %1201 = vmatpush1.msra.mxu0 0.0
  %1202 = vmatprep.subr.mxu0 0.0
  %1203 = vmatpush1.msra.mxu0 0.0
  %1204 = vmatprep.subr.mxu0 0.0
  %1205 = vmatpush1.msra.mxu0 0.0
  %1206 = vmatprep.subr.mxu0 0.0
  %1207 = vmatpush1.msra.mxu0 0.0
  %1208 = vmatprep.subr.mxu0 0.0
  %1209 = vmatpush1.msra.mxu0 0.0
  %1210 = vmatprep.subr.mxu0 0.0
  %1211 = vmatpush1.msra.mxu0 0.0
  %1212 = vmatprep.subr.mxu0 0.0
  %1213 = vmatpush1.msra.mxu0 0.0
  %1214 = vmatprep.subr.mxu0 0.0
  %1215 = vmatpush1.msra.mxu0 0.0
  %1216 = vmatprep.subr.mxu0 0.0
  %1217 = vmatpush1.msra.mxu0 0.0
  %1218 = vmatprep.subr.mxu0 0.0
  %1219 = vmatpush1.msra.mxu0 0.0
  %1220 = vmatprep.subr.mxu0 0.0
  %1221 = vmatpush1.msra.mxu0 0.0
  %1222 = vmatprep.subr.mxu0 0.0
  %1223 = vmatpush1.msra.mxu0 0.0
  %1224 = vmatprep.subr.mxu0 0.0
  %1225 = vmatpush1.msra.mxu0 0.0
  %1226 = vmatprep.subr.mxu0 0.0
  %1227 = vmatpush1.msra.mxu0 0.0
  %1228 = vmatprep.subr.mxu0 0.0
  %1229 = vmatpush1.msra.mxu0 0.0
  %1230 = vmatprep.subr.mxu0 0.0
  %1231 = vmatpush1.msra.mxu0 0.0
  %1232 = vmatprep.subr.mxu0 0.0
  %1233 = vmatpush1.msra.mxu0 0.0
  %1234 = vmatprep.subr.mxu0 0.0
  %1235 = vmatpush1.msra.mxu0 0.0
  %1236 = vmatprep.subr.mxu0 0.0
  %1237 = vmatpush1.msra.mxu0 0.0
  %1238 = vmatprep.subr.mxu0 0.0
  %1239 = vmatpush1.msra.mxu0 0.0
  %1240 = vmatprep.subr.mxu0 0.0
  %1241 = vmatpush1.msra.mxu0 0.0
  %1242 = vmatprep.subr.mxu0 0.0
  %1243 = vmatpush1.msra.mxu0 0.0
  %1244 = vmatprep.subr.mxu0 0.0
  %1245 = vmatpush1.msra.mxu0 0.0
  %1246 = vmatprep.subr.mxu0 0.0
  %1247 = vmatpush1.msra.mxu0 0.0
  %1248 = vmatprep.subr.mxu0 0.0
  %1249 = vmatpush1.msra.mxu0 0.0
  %1250 = vmatprep.mubr.f32.mxu0 0.0
  %1251 = vmatmul.mubr.f32.gmra.mrb[0].mxu0 %v1184
  %v1252 = vpop.f32.mrb[0].mxu0
  %v1253 = vadd.f32 0.0, %v1252
  %v1254 = vpop.f32.mrb[0].mxu0
  %1255 = vdwg.mxu0
  %v1257 = vrot.slane %v1253, 1
  %v1258 = vrot.slane %v1253, 2
  %v1261 = vadd.f32 %v11, %v1257
  %v1262 = vadd.f32 %v12, %v1258
  %v1263 = vxor.u32 %v1261, 2147483648
  %v1264 = vxor.u32 %v1262, 2147483648
  %v1265 = vmul.f32 %v1263, 1.442695
  %v1266 = vpow.pop %v1265
  %v1267 = vmul.f32 %v1264, 1.442695
  %v1268 = vpow.pop %v1267
  %v1269 = vadd.f32 %v1266, 1.0
  %v1270 = vadd.f32 %v1268, 1.0
  %v1271 = vrcp.pop %v1269
  %v1272 = vmul.f32 1.0, %v1271
  %v1273 = vrcp.pop %v1270
  %v1274 = vmul.f32 1.0, %v1273
  %v1275 = vtanh.pop %v1261
  %v1276 = vtanh.pop %v1262
  %v1279 = vrot.slane %v1134, 7
  %v1280 = vrot.slane %v1135, 7
  %v1283 = vmul.f32 %v1272, %v1279
  %v1284 = vmul.f32 %v1274, %v1280
  %1287 = vrot.lane.b32.xlu0 %v1275, 64
  %v1288 = vpop.permute.xlu0 %1287
  %1289 = vrot.lane.b32.xlu0 %v1276, 64
  %v1290 = vpop.permute.xlu0 %1289
  %v1293 = vmul.f32 %v1272, %v1288
  %v1294 = vmul.f32 %v1274, %v1290
  %1297 = vrot.lane.b32.xlu0 %v1293, 32
  %v1298 = vpop.permute.xlu0 %1297
  %1299 = vrot.lane.b32.xlu0 %v1294, 32
  %v1300 = vpop.permute.xlu0 %1299
  %v1303 = vadd.f32 %v1283, %v1298
  %v1304 = vadd.f32 %v1284, %v1300
  %v1305 = vtanh.pop %v1303
  %v1306 = vtanh.pop %v1304
  %1309 = vrot.lane.b32.xlu0 %v1305, 64
  %v1310 = vpop.permute.xlu0 %1309
  %1311 = vrot.lane.b32.xlu0 %v1306, 64
  %v1312 = vpop.permute.xlu0 %1311
  %v1315 = vmul.f32 %v1272, %v1310
  %v1316 = vmul.f32 %v1274, %v1312
  %v1319 = vcombine.high %v1315, %v1315
  %v1321 = vunpack.c.l.s4 1983009808
  %v1322 = vunpack.c.0.s8 %v1321
  %v1323 = vlaneseq
  %v1324 = vshrl.u32 %v1323, 7
  %v1325 = vsub.s32 %v1322, %v1324
  %v1326 = vrot.slane %v1319, %v1325
  %v1327 = vcombine.high %v1326, %v1326
  %v1328 = vcombine.high %v1316, %v1316
  %v1330 = vunpack.c.l.s4 1983009808
  %v1331 = vunpack.c.0.s8 %v1330
  %v1332 = vlaneseq
  %v1333 = vshrl.u32 %v1332, 7
  %v1334 = vsub.s32 %v1331, %v1333
  %v1335 = vrot.slane %v1328, %v1334
  %v1336 = vcombine.high %v1335, %v1335
  %v1337 = vrot.slane %v1327, 1
  %v1338 = vsel %vm161, %v1337, %v1337
  %v1339 = vsel %vm163, %v1337, %v1338
  %v1340 = vsel %vm166, %v1336, %v1339
  %v1341 = vsel %vm168, %v1336, %v1340
  %v1342 = vsel %vm170, %v1336, %v1341
  %v1343 = vsel %vm172, %v1336, %v1342
  %1345 = vst.msk [vmem:[%s2 + $0x2] sm:$0x3] %vm674, %v1343
  // Predicated region
  $region10: #{lstm_forward_pallas.1} parent=0 // pred_check
    _
  $region11: #{lstm_forward_pallas.1} parent=0 // pred_check_branch
    %1347 = sbr.rel (0) target = $region13
  $region12: #{lstm_forward_pallas.1} parent=0 // pred_region
    _
  $region13: #{lstm_forward_pallas.1} parent=0 // pred_fallthru
    _
  // Predicated region
  $region14: #{lstm_forward_pallas.1} parent=0 // pred_check
    _
  $region15: #{lstm_forward_pallas.1} parent=0 // pred_check_branch
    %1349 = sbr.rel (0) target = $region17
  $region16: #{lstm_forward_pallas.1} parent=0 // pred_region
    _
  $region17: #{lstm_forward_pallas.1} parent=0 // pred_fallthru
    _

</llo_original>
